<compile_context>
chip_gen: v5e
topology: v5e:2x2
jax: 0.10.0
libtpu: 0.0.40
codegen_flags: <defaults>
</compile_context>

<pallas_src>
import functools

import jax
import jax.numpy as jnp
from jax.experimental import pallas as pl
from jax.experimental.pallas import tpu as pltpu


def _round_up(x, m):
    return (x + m - 1) // m * m


def _softplus(x):
    # Numerically stable, branch-free softplus (matches torch.nn.Softplus
    # beta=1 within f32 tolerance for all x, including the x > 20 region).
    return jnp.maximum(x, 0.0) + jnp.log1p(jnp.exp(-jnp.abs(x)))


def combiner4_kernel(z_ref, g_ref, wzh_ref, bzh_ref, wout_ref, bout_ref,
                     out_ref, *, z_pad):
    # Cast activations to the (possibly bf16) weight dtype; no-op for f32.
    z = z_ref[...].astype(wzh_ref.dtype)

    # h_combined = 1/2 * (tanh(z @ Wzh + bzh) + g_bw)
    h = jnp.tanh(jnp.dot(z, wzh_ref[...], preferred_element_type=jnp.float32)
                 + bzh_ref[...])
    h_combined = 0.5 * (h + g_ref[...].astype(jnp.float32))

    # Fused projection: [loc | pre_scale] in one matmul (each half padded to a
    # 128-lane multiple in the wrapper, so the split below is lane-aligned).
    hc = h_combined.astype(wout_ref.dtype)
    fused = (jnp.dot(hc, wout_ref[...], preferred_element_type=jnp.float32)
             + bout_ref[...])

    # Two lane-aligned stores; softplus only on the scale half (halves the
    # exp/log1p count vs masking the whole fused tile).
    out_ref[:, :z_pad] = fused[:, :z_pad].astype(out_ref.dtype)
    out_ref[:, z_pad:] = _softplus(fused[:, z_pad:]).astype(out_ref.dtype)


def combiner4_forward(z_t, g_bw_t, params, *, use_bf16_matmul=False,
                      out_dtype=jnp.float32, tile_b=None):
    """params: dict with w_zh, b_zh, wloc, bloc, wscale, bscale
    (weights stored transposed as [in_dim, out_dim])."""
    B, z_dim = z_t.shape
    rnn_dim = g_bw_t.shape[1]

    # ---- Wrapper-side fusion + lane padding of the two output projections ---
    z_pad = _round_up(z_dim, 128)
    pad_cols = z_pad - z_dim

    def pad_half(w, b):
        return (jnp.pad(w, ((0, 0), (0, pad_cols))),
                jnp.pad(b, ((0, 0), (0, pad_cols))))

    wloc_p, bloc_p = pad_half(params["wloc"], params["bloc"])
    wscale_p, bscale_p = pad_half(params["wscale"], params["bscale"])
    w_out = jnp.concatenate([wloc_p, wscale_p], axis=1)   # [rnn_dim, 2*z_pad]
    b_out = jnp.concatenate([bloc_p, bscale_p], axis=1)   # [1, 2*z_pad]
    w_zh = params["w_zh"]
    b_zh = params["b_zh"]
    out_pad = 2 * z_pad

    # bf16 matmul operands: cast the loop-invariant weights once here (biases
    # stay f32 — they are added to the f32 accumulator).
    if use_bf16_matmul:
        w_zh = w_zh.astype(jnp.bfloat16)
        w_out = w_out.astype(jnp.bfloat16)

    # ---- Batch tiling ----
    if tile_b is None:
        if B <= 8:
            tile_b = B                      # full batch; single tiny tile
        else:
            # Aim for >=2 grid steps (v7x megacore sharding) while keeping
            # tiles large enough to amortize per-step overhead; cap at 1024.
            tile_b = min(1024, max(8, _round_up(pl.cdiv(B, 2), 8)))
    grid = (pl.cdiv(B, tile_b),)

    # VMEM budget: double-buffered activation tiles + resident weights, with
    # 2x headroom; raise the scoped limit when large tiles need it.
    act_bytes = 4  # activations kept f32 in HBM
    per_step = tile_b * (z_dim + rnn_dim + out_pad) * act_bytes
    weight_bytes = (w_zh.size * w_zh.dtype.itemsize
                    + w_out.size * w_out.dtype.itemsize
                    + 4 * (b_zh.size + b_out.size))
    vmem_limit = int(min(100 * 2**20,
                         max(32 * 2**20, 2 * (2 * per_step + weight_bytes))))

    def act_spec(dim):
        return pl.BlockSpec((tile_b, dim), lambda i: (i, 0))

    def const_spec(arr):
        return pl.BlockSpec(arr.shape, lambda i: (0, 0))

    # Advisory cost estimate so XLA schedules this call against neighbors.
    flops = 2 * B * z_dim * rnn_dim + 2 * B * rnn_dim * out_pad
    transcendentals = B * rnn_dim + 2 * B * z_pad      # tanh + exp/log1p
    bytes_accessed = (4 * (z_t.size + g_bw_t.size)
                      + weight_bytes
                      + B * out_pad * jnp.dtype(out_dtype).itemsize)

    fused_out = pl.pallas_call(
        functools.partial(combiner4_kernel, z_pad=z_pad),
        out_shape=jax.ShapeDtypeStruct((B, out_pad), out_dtype),
        grid=grid,
        in_specs=[
            act_spec(z_dim),      # z_t
            act_spec(rnn_dim),    # g_bw_t
            const_spec(w_zh),     # weights stay VMEM-resident (constant maps)
            const_spec(b_zh),
            const_spec(w_out),
            const_spec(b_out),
        ],
        out_specs=pl.BlockSpec((tile_b, out_pad), lambda i: (i, 0)),
        compiler_params=pltpu.CompilerParams(
            dimension_semantics=("parallel",),
            vmem_limit_bytes=vmem_limit),
        cost_estimate=pl.CostEstimate(
            flops=int(flops),
            transcendentals=int(transcendentals),
            bytes_accessed=int(bytes_accessed)),
    )(z_t, g_bw_t, w_zh, b_zh, w_out, b_out)

    loc = fused_out[:, :z_dim]
    scale = fused_out[:, z_pad:z_pad + z_dim]
    return loc, scale


def init_params(key, z_dim, rnn_dim):
    """Deterministic init mimicking nn.Linear's U(-1/sqrt(fan_in), 1/sqrt(fan_in)).
    Weights stored transposed: [in_dim, out_dim]."""
    ks = jax.random.split(key, 6)

    def lin(kw, kb, in_dim, out_dim):
        bound = 1.0 / jnp.sqrt(in_dim)
        w = jax.random.uniform(kw, (in_dim, out_dim), jnp.float32, -bound, bound)
        b = jax.random.uniform(kb, (1, out_dim), jnp.float32, -bound, bound)
        return w, b

    w_zh, b_zh = lin(ks[0], ks[1], z_dim, rnn_dim)      # lin_z_to_hidden
    wloc, bloc = lin(ks[2], ks[3], rnn_dim, z_dim)      # lin_hidden_to_loc
    wscale, bscale = lin(ks[4], ks[5], rnn_dim, z_dim)  # lin_hidden_to_scale
    return dict(w_zh=w_zh, b_zh=b_zh, wloc=wloc, bloc=bloc,
                wscale=wscale, bscale=bscale)


def reference_forward(z_t, g_bw_t, p):
    h = jnp.tanh(z_t @ p["w_zh"] + p["b_zh"])
    hc = 0.5 * (h + g_bw_t)
    loc = hc @ p["wloc"] + p["bloc"]
    scale = jax.nn.softplus(hc @ p["wscale"] + p["bscale"])
    return loc, scale


if __name__ == "__main__":
    # Small shapes consistent with the module's forward (validate here;
    # benchmark/tune only at production batch and feature sizes).
    batch, z_dim, rnn_dim = 8, 16, 32

    key = jax.random.PRNGKey(0)
    k_z, k_g, k_p = jax.random.split(key, 3)

    z_t = jax.random.normal(k_z, (batch, z_dim), jnp.float32)
    g_bw_t = jax.random.normal(k_g, (batch, rnn_dim), jnp.float32)
    params = init_params(k_p, z_dim, rnn_dim)

    loc, scale = combiner4_forward(z_t, g_bw_t, params)
    jax.block_until_ready((loc, scale))

    # Sanity check against a pure-JAX reference (f32 path).
    loc_ref, scale_ref = reference_forward(z_t, g_bw_t, params)
    assert loc.shape == (batch, z_dim) and scale.shape == (batch, z_dim)
    assert jnp.allclose(loc, loc_ref, atol=1e-5, rtol=1e-5)
    assert jnp.allclose(scale, scale_ref, atol=1e-5, rtol=1e-5)

    print("KERNEL_OK")
</pallas_src>

<mosaic_0001>
module attributes {stable_mosaic.version = 11 : i64} {
  func.func @combiner4_kernel(%arg0: i32, %arg1: memref<8x16xf32, #tpu.memory_space<vmem>>, %arg2: memref<8x32xf32, #tpu.memory_space<vmem>>, %arg3: memref<16x32xf32, #tpu.memory_space<vmem>>, %arg4: memref<1x32xf32, #tpu.memory_space<vmem>>, %arg5: memref<32x256xf32, #tpu.memory_space<vmem>>, %arg6: memref<1x256xf32, #tpu.memory_space<vmem>>, %arg7: memref<8x256xf32, #tpu.memory_space<vmem>>) attributes {dimension_semantics = [#tpu.dimension_semantics<parallel>], iteration_bounds = array<i64: 1>, scalar_prefetch = 0 : i64, scratch_operands = 0 : i64, tpu.core_type = #tpu.core_type<tc>, window_params = [{transform_indices = @transform_0, window_bounds = array<i64: 8, 16>}, {transform_indices = @transform_1, window_bounds = array<i64: 8, 32>}, {pipeline_mode = #tpu.pipeline_mode<synchronous>, transform_indices = @transform_2, window_bounds = array<i64: 16, 32>}, {pipeline_mode = #tpu.pipeline_mode<synchronous>, transform_indices = @transform_3, window_bounds = array<i64: 1, 32>}, {pipeline_mode = #tpu.pipeline_mode<synchronous>, transform_indices = @transform_4, window_bounds = array<i64: 32, 256>}, {pipeline_mode = #tpu.pipeline_mode<synchronous>, transform_indices = @transform_5, window_bounds = array<i64: 1, 256>}, {transform_indices = @transform_6, window_bounds = array<i64: 8, 256>}]} {
    %c0 = arith.constant 0 : index
    %c0_0 = arith.constant 0 : index
    %0 = vector.load %arg1[%c0, %c0_0] : memref<8x16xf32, #tpu.memory_space<vmem>>, vector<8x16xf32>
    %c0_1 = arith.constant 0 : index
    %c0_2 = arith.constant 0 : index
    %1 = vector.load %arg3[%c0_1, %c0_2] : memref<16x32xf32, #tpu.memory_space<vmem>>, vector<16x32xf32>
    %cst = arith.constant dense<0.000000e+00> : vector<8x32xf32>
    %2 = tpu.matmul %0, %1, %cst {dimension_numbers = #tpu.dot_dimension_numbers<[1], [0], [0], [1], [0, 0, 1, 1], [], []>} : vector<8x16xf32>, vector<16x32xf32>, vector<8x32xf32> -> vector<8x32xf32>
    %c0_3 = arith.constant 0 : index
    %c0_4 = arith.constant 0 : index
    %3 = vector.load %arg4[%c0_3, %c0_4] : memref<1x32xf32, #tpu.memory_space<vmem>>, vector<1x32xf32>
    %4 = vector.broadcast %3 : vector<1x32xf32> to vector<8x32xf32>
    %5 = arith.addf %2, %4 : vector<8x32xf32>
    %6 = math.tanh %5 : vector<8x32xf32>
    %c0_5 = arith.constant 0 : index
    %c0_6 = arith.constant 0 : index
    %7 = vector.load %arg2[%c0_5, %c0_6] : memref<8x32xf32, #tpu.memory_space<vmem>>, vector<8x32xf32>
    %8 = arith.addf %6, %7 : vector<8x32xf32>
    %cst_7 = arith.constant 5.000000e-01 : f32
    %9 = vector.broadcast %cst_7 : f32 to vector<8x32xf32>
    %10 = arith.mulf %9, %8 : vector<8x32xf32>
    %c0_8 = arith.constant 0 : index
    %c0_9 = arith.constant 0 : index
    %11 = vector.load %arg5[%c0_8, %c0_9] : memref<32x256xf32, #tpu.memory_space<vmem>>, vector<32x256xf32>
    %cst_10 = arith.constant dense<0.000000e+00> : vector<8x256xf32>
    %12 = tpu.matmul %10, %11, %cst_10 {dimension_numbers = #tpu.dot_dimension_numbers<[1], [0], [0], [1], [0, 0, 1, 1], [], []>} : vector<8x32xf32>, vector<32x256xf32>, vector<8x256xf32> -> vector<8x256xf32>
    %c0_11 = arith.constant 0 : index
    %c0_12 = arith.constant 0 : index
    %13 = vector.load %arg6[%c0_11, %c0_12] : memref<1x256xf32, #tpu.memory_space<vmem>>, vector<1x256xf32>
    %14 = vector.broadcast %13 : vector<1x256xf32> to vector<8x256xf32>
    %15 = arith.addf %12, %14 : vector<8x256xf32>
    %16 = vector.extract_strided_slice %15 {offsets = [0, 0], sizes = [8, 128], strides = [1, 1]} : vector<8x256xf32> to vector<8x128xf32>
    %c0_13 = arith.constant 0 : index
    %c0_14 = arith.constant 0 : index
    %17 = vector.load %arg7[%c0_13, %c0_14] : memref<8x256xf32, #tpu.memory_space<vmem>>, vector<8x128xf32>
    tpu.vector_store %arg7[%c0_13, %c0_14], %16 {strides = array<i32>} : memref<8x256xf32, #tpu.memory_space<vmem>>, vector<8x128xf32>,
    %18 = vector.extract_strided_slice %15 {offsets = [0, 128], sizes = [8, 128], strides = [1, 1]} : vector<8x256xf32> to vector<8x128xf32>
    %cst_15 = arith.constant 0.000000e+00 : f32
    %19 = vector.broadcast %cst_15 : f32 to vector<8x128xf32>
    %20 = arith.maximumf %18, %19 : vector<8x128xf32>
    %21 = math.absf %18 : vector<8x128xf32>
    %cst_16 = arith.constant 0.000000e+00 : f32
    %22 = vector.broadcast %cst_16 : f32 to vector<8x128xf32>
    %23 = arith.subf %22, %21 : vector<8x128xf32>
    %24 = math.exp %23 : vector<8x128xf32>
    %25 = math.log1p %24 : vector<8x128xf32>
    %26 = arith.addf %20, %25 : vector<8x128xf32>
    %c0_17 = arith.constant 0 : index
    %c128 = arith.constant 128 : index
    %27 = vector.load %arg7[%c0_17, %c128] : memref<8x256xf32, #tpu.memory_space<vmem>>, vector<8x128xf32>
    tpu.vector_store %arg7[%c0_17, %c128], %26 {strides = array<i32>} : memref<8x256xf32, #tpu.memory_space<vmem>>, vector<8x128xf32>,
    return
  }
  func.func @transform_0(%arg0: i32) -> (i32, i32) {
    %c0_i32 = arith.constant 0 : i32
    %c0_i32_0 = arith.constant 0 : i32
    return %arg0, %c0_i32 : i32, i32
  }
  func.func @transform_1(%arg0: i32) -> (i32, i32) {
    %c0_i32 = arith.constant 0 : i32
    %c0_i32_0 = arith.constant 0 : i32
    return %arg0, %c0_i32 : i32, i32
  }
  func.func @transform_2(%arg0: i32) -> (i32, i32) {
    %c0_i32 = arith.constant 0 : i32
    %c0_i32_0 = arith.constant 0 : i32
    %c0_i32_1 = arith.constant 0 : i32
    return %c0_i32, %c0_i32_0 : i32, i32
  }
  func.func @transform_3(%arg0: i32) -> (i32, i32) {
    %c0_i32 = arith.constant 0 : i32
    %c0_i32_0 = arith.constant 0 : i32
    %c0_i32_1 = arith.constant 0 : i32
    return %c0_i32, %c0_i32_0 : i32, i32
  }
  func.func @transform_4(%arg0: i32) -> (i32, i32) {
    %c0_i32 = arith.constant 0 : i32
    %c0_i32_0 = arith.constant 0 : i32
    %c0_i32_1 = arith.constant 0 : i32
    return %c0_i32, %c0_i32_0 : i32, i32
  }
  func.func @transform_5(%arg0: i32) -> (i32, i32) {
    %c0_i32 = arith.constant 0 : i32
    %c0_i32_0 = arith.constant 0 : i32
    %c0_i32_1 = arith.constant 0 : i32
    return %c0_i32, %c0_i32_0 : i32, i32
  }
  func.func @transform_6(%arg0: i32) -> (i32, i32) {
    %c0_i32 = arith.constant 0 : i32
    %c0_i32_0 = arith.constant 0 : i32
    return %arg0, %c0_i32 : i32, i32
  }
}

</mosaic_0001>

<llo_original>
// kernel: tpu_custom_call.1
$region0: #{tpu_custom_call.1}
  #allocation0 [shape = 'u32[]', space=smem, size = 0x4, offset = 0x4, fixed_abs, tag = 'smem constant byte address 0x4 - core index']
  #allocation1 [shape = 'u32[72,128]{1,0:T(1,128)}', space=vmem, size = 0x9000, scoped, tag = 'internal scratch']
  %s0 = inlined_call_operand.hbm [shape: f32[8,16], index: 0, kind: input, shape index: {}]
  %s1 = inlined_call_operand.hbm [shape: f32[8,32], index: 1, kind: input, shape index: {}]
  %s2 = inlined_call_operand.hbm [shape: f32[16,32], index: 2, kind: input, shape index: {}]
  %s3 = inlined_call_operand.vmem [shape: f32[1,32], index: 3, kind: input, shape index: {}]
  %s4 = inlined_call_operand.hbm [shape: f32[32,256], index: 4, kind: input, shape index: {}]
  %s5 = inlined_call_operand.vmem [shape: f32[1,256], index: 5, kind: input, shape index: {}]
  %s6 = inlined_call_operand.hbm [shape: f32[8,256], index: 6, kind: output, shape index: {}]
  %s7 = sld [smem:[#allocation0]]
  $region50: #{tpu_custom_call.1} parent=0
    _
  %s9 = ssub.s32 1, %s7
  %s10 = scalar_select 0, %s9, %s7
  $region1: #{tpu_custom_call.1} parent=0
    #allocation2 [shape = 'u8[4096]{0}', space=vmem, size = 0x1000, scoped, tag = 'input window, operand 0, single buffered']
    #allocation3 [shape = 's32[1]{0}', space=sflag, size = 0x4, scoped, tag = 'scoped memory for tpu_custom_call.1']
    #allocation4 [shape = 's32[1]{0}', space=sflag, size = 0x4, scoped, tag = 'scoped memory for tpu_custom_call.1']
    #allocation5 [shape = 'u8[4096]{0}', space=vmem, size = 0x1000, scoped, tag = 'input window, operand 1, single buffered']
    #allocation6 [shape = 's32[1]{0}', space=sflag, size = 0x4, scoped, tag = 'scoped memory for tpu_custom_call.1']
    #allocation7 [shape = 'u8[8192]{0}', space=vmem, size = 0x2000, scoped, tag = 'input window, operand 2, single buffered']
    #allocation8 [shape = 'u8[32768]{0}', space=vmem, size = 0x8000, scoped, tag = 'input window, operand 4, single buffered']
    #allocation9 [shape = 's32[1]{0}', space=sflag, size = 0x4, scoped, tag = 'scoped memory for tpu_custom_call.1']
    #allocation10 [shape = 'u8[8192]{0}', space=vmem, size = 0x2000, scoped, tag = 'output window, operand 0, single buffered']
    %11 = vsyncpa [#allocation3], 0
    %12 = vsyncpa [#allocation6], 0
    %13 = vsyncpa [#allocation9], 0
    %14 = vsyncpa [#allocation4], 0
    // Predicated region
    $region2: #{tpu_custom_call.1} parent=1 // pred_check
      _
    $region3: #{tpu_custom_call.1} parent=1 // pred_check_branch
      %16 = sbr.rel (0) target = $region5
    $region4: #{tpu_custom_call.1} parent=1 // pred_region
      %18 = vsyncadd [#allocation3], 0
      %s20 = sshll.u32 %s0, 4
      %s21 = int_to_ptr.hbm [resolvable:$true] %s20
      %s22 = sshll.u32 [#allocation2], 4
      %s23 = int_to_ptr.vmem [resolvable:$true] %s22
      %25 = dma.hbm_to_vmem [thread:$0]  %s21, 128, %s23, [#allocation3]
    $region5: #{tpu_custom_call.1} parent=1 // pred_fallthru
      _
    // Predicated region
    $region6: #{tpu_custom_call.1} parent=1 // pred_check
      _
    $region7: #{tpu_custom_call.1} parent=1 // pred_check_branch
      %27 = sbr.rel (0) target = $region9
    $region8: #{tpu_custom_call.1} parent=1 // pred_region
      %29 = vsyncadd [#allocation6], 0
      %s31 = sshll.u32 %s1, 4
      %s32 = int_to_ptr.hbm [resolvable:$true] %s31
      %s33 = sshll.u32 [#allocation5], 4
      %s34 = int_to_ptr.vmem [resolvable:$true] %s33
      %36 = dma.hbm_to_vmem [thread:$0]  %s32, 128, %s34, [#allocation6]
    $region9: #{tpu_custom_call.1} parent=1 // pred_fallthru
      _
    // Predicated region
    $region10: #{tpu_custom_call.1} parent=1 // pred_check
      _
    $region11: #{tpu_custom_call.1} parent=1 // pred_check_branch
      %38 = sbr.rel (0) target = $region13
    $region12: #{tpu_custom_call.1} parent=1 // pred_region
      %40 = vsyncadd [#allocation6], 0
      %s41 = sshll.u32 %s2, 4
      %s42 = int_to_ptr.hbm [resolvable:$true] %s41
      %s43 = sshll.u32 [#allocation7], 4
      %s44 = int_to_ptr.vmem [resolvable:$true] %s43
      %49 = dma.hbm_to_vmem [thread:$0]  %s42, 256, %s44, [#allocation6], 128, 128, 8
    $region13: #{tpu_custom_call.1} parent=1 // pred_fallthru
      _
    // Predicated region
    $region14: #{tpu_custom_call.1} parent=1 // pred_check
      _
    $region15: #{tpu_custom_call.1} parent=1 // pred_check_branch
      %51 = sbr.rel (0) target = $region17
    $region16: #{tpu_custom_call.1} parent=1 // pred_region
      _
    $region17: #{tpu_custom_call.1} parent=1 // pred_fallthru
      _
    // Predicated region
    $region18: #{tpu_custom_call.1} parent=1 // pred_check
      _
    $region19: #{tpu_custom_call.1} parent=1 // pred_check_branch
      %53 = sbr.rel (0) target = $region21
    $region20: #{tpu_custom_call.1} parent=1 // pred_region
      %55 = vsyncadd [#allocation9], 0
      %s56 = sshll.u32 %s4, 4
      %s57 = int_to_ptr.hbm [resolvable:$true] %s56
      %s58 = sshll.u32 [#allocation8], 4
      %s59 = int_to_ptr.vmem [resolvable:$true] %s58
      %64 = dma.hbm_to_vmem [thread:$0]  %s57, 1024, %s59, [#allocation9], 256, 256, 16
    $region21: #{tpu_custom_call.1} parent=1 // pred_fallthru
      _
    // Predicated region
    $region22: #{tpu_custom_call.1} parent=1 // pred_check
      _
    $region23: #{tpu_custom_call.1} parent=1 // pred_check_branch
      %66 = sbr.rel (0) target = $region25
    $region24: #{tpu_custom_call.1} parent=1 // pred_region
      _
    $region25: #{tpu_custom_call.1} parent=1 // pred_fallthru
      _
    // Predicated region
    $region26: #{tpu_custom_call.1} parent=1 // pred_check
      _
    $region27: #{tpu_custom_call.1} parent=1 // pred_check_branch
      %68 = sbr.rel (0) target = $region29
    $region28: #{tpu_custom_call.1} parent=1 // pred_region
      %70 = dma.done [#allocation3], 128
    $region29: #{tpu_custom_call.1} parent=1 // pred_fallthru
      _
    // Predicated region
    $region30: #{tpu_custom_call.1} parent=1 // pred_check
      _
    $region31: #{tpu_custom_call.1} parent=1 // pred_check_branch
      %72 = sbr.rel (0) target = $region33
    $region32: #{tpu_custom_call.1} parent=1 // pred_region
      %74 = dma.done [#allocation6], 128
    $region33: #{tpu_custom_call.1} parent=1 // pred_fallthru
      _
    // Predicated region
    $region34: #{tpu_custom_call.1} parent=1 // pred_check
      _
    $region35: #{tpu_custom_call.1} parent=1 // pred_check_branch
      %76 = sbr.rel (0) target = $region37
    $region36: #{tpu_custom_call.1} parent=1 // pred_region
      %78 = dma.done [#allocation6], 256
    $region37: #{tpu_custom_call.1} parent=1 // pred_fallthru
      _
    // Predicated region
    $region38: #{tpu_custom_call.1} parent=1 // pred_check
      _
    $region39: #{tpu_custom_call.1} parent=1 // pred_check_branch
      %80 = sbr.rel (0) target = $region41
    $region40: #{tpu_custom_call.1} parent=1 // pred_region
      %82 = dma.done [#allocation9], 1024
    $region41: #{tpu_custom_call.1} parent=1 // pred_fallthru
      _
    %v83 = vld [vmem:[#allocation2] sm:$0xff]
    %v84 = vld [vmem:[#allocation7] sm:$0xff]
    %v85 = vld [vmem:[#allocation7 + $0x8] sm:$0xff]
    %v86 = vld [vmem:[%s3] sm:$0x1]
    %v88 = vperm.slane %v86, 0
    %vm90 = vcmask 130048
    %v92 = vsel %vm90, %v83, 0
    %94 = vmatpush.msra.mxu0 0.0
    %95 = vmatpush.msra.mxu0 0.0
    %96 = vmatpush.msra.mxu0 0.0
    %97 = vmatpush.msra.mxu0 0.0
    %98 = vmatpush.msra.mxu0 0.0
    %99 = vmatpush.msra.mxu0 0.0
    %100 = vmatpush.msra.mxu0 0.0
    %101 = vmatpush.msra.mxu0 0.0
    %102 = vmatpush.msra.mxu0 0.0
    %103 = vmatpush.msra.mxu0 0.0
    %104 = vmatpush.msra.mxu0 0.0
    %105 = vmatpush.msra.mxu0 0.0
    %106 = vmatpush.msra.mxu0 0.0
    %107 = vmatpush.msra.mxu0 0.0
    %108 = vmatpush.msra.mxu0 %v85
    %109 = vmatpush.msra.mxu0 %v84
    %110 = vmatmul.f32.gmra.mxu0 %v92
    %v111 = vpop.f32.mrf.mxu0
    %v112 = vadd.f32 %v88, %v111
    %113 = vdwg.mxu0
    %v114 = vtanh.pop %v112
    %v115 = vld [vmem:[#allocation5] sm:$0xff]
    %v116 = vadd.f32 %v114, %v115
    %v117 = vmul.f32 %v116, 0.5
    %v118 = vld [vmem:[#allocation8] sm:$0xff]
    %v119 = vld [vmem:[#allocation8 + $0x8] sm:$0xff]
    %v120 = vld [vmem:[#allocation8 + $0x10] sm:$0xff]
    %v121 = vld [vmem:[#allocation8 + $0x18] sm:$0xff]
    %v122 = vld [vmem:[#allocation8 + $0x20] sm:$0xff]
    %v123 = vld [vmem:[#allocation8 + $0x28] sm:$0xff]
    %v124 = vld [vmem:[#allocation8 + $0x30] sm:$0xff]
    %v125 = vld [vmem:[#allocation8 + $0x38] sm:$0xff]
    %v126 = vld [vmem:[%s5] sm:$0x3]
    %v128 = vperm.slane %v126, 0
    %v129 = vperm.slane %v126, 1
    %vm132 = vcmask 261120
    %v134 = vsel %vm132, %v117, 0
    %136 = vmatpush.msra.mxu0 0.0
    %137 = vmatpush.msra.mxu0 0.0
    %138 = vmatpush.msra.mxu0 0.0
    %139 = vmatpush.msra.mxu0 0.0
    %140 = vmatpush.msra.mxu0 0.0
    %141 = vmatpush.msra.mxu0 0.0
    %142 = vmatpush.msra.mxu0 0.0
    %143 = vmatpush.msra.mxu0 0.0
    %144 = vmatpush.msra.mxu0 0.0
    %145 = vmatpush.msra.mxu0 0.0
    %146 = vmatpush.msra.mxu0 0.0
    %147 = vmatpush.msra.mxu0 0.0
    %148 = vmatpush.msra.mxu0 %v124
    %149 = vmatpush.msra.mxu0 %v122
    %150 = vmatpush.msra.mxu0 %v120
    %151 = vmatpush.msra.mxu0 %v118
    %152 = vmatmul.f32.gmra.mxu0 %v134
    %v153 = vpop.f32.mrf.mxu0
    %v154 = vadd.f32 %v128, %v153
    %155 = vdwg.mxu0
    %156 = vmatpush.msra.mxu0 0.0
    %157 = vmatpush.msra.mxu0 0.0
    %158 = vmatpush.msra.mxu0 0.0
    %159 = vmatpush.msra.mxu0 0.0
    %160 = vmatpush.msra.mxu0 0.0
    %161 = vmatpush.msra.mxu0 0.0
    %162 = vmatpush.msra.mxu0 0.0
    %163 = vmatpush.msra.mxu0 0.0
    %164 = vmatpush.msra.mxu0 0.0
    %165 = vmatpush.msra.mxu0 0.0
    %166 = vmatpush.msra.mxu0 0.0
    %167 = vmatpush.msra.mxu0 0.0
    %168 = vmatpush.msra.mxu0 %v125
    %169 = vmatpush.msra.mxu0 %v123
    %170 = vmatpush.msra.mxu0 %v121
    %171 = vmatpush.msra.mxu0 %v119
    %172 = vmatmul.f32.gmra.mxu0 %v134
    %v173 = vpop.f32.mrf.mxu0
    %v174 = vadd.f32 %v129, %v173
    %175 = vdwg.mxu0
    %176 = vst [vmem:[#allocation10] sm:$0xff] %v154
    %v177 = vmax.f32 %v174, 0.0
    %v178 = vand.u32 2147483647, %v174
    %v179 = vsub.f32 0.0, %v178
    %v180 = vmul.f32 %v179, 1.442695
    %v181 = vpow.pop %v180
    %v182 = vadd.f32 %v181, 1.0
    %v183 = vlog2.pop %v182
    %v184 = vmul.f32 %v183, 0.6931472
    %v185 = vmul.f32 -0.5, %v181
    %v186 = vadd.f32 %v185, 1.0
    %v187 = vmul.f32 %v186, %v181
    %v188 = vand.u32 2147483647, %v181
    %vm189 = vcmp.lt.f32.partialorder %v188, 0.0004427343
    %v190 = vsel %vm189, %v187, %v184
    %v191 = vadd.f32 %v177, %v190
    %192 = vst [vmem:[#allocation10 + $0x8] sm:$0xff] %v191
    // Predicated region
    $region42: #{tpu_custom_call.1} parent=1 // pred_check
      _
    $region43: #{tpu_custom_call.1} parent=1 // pred_check_branch
      %194 = sbr.rel (0) target = $region45
    $region44: #{tpu_custom_call.1} parent=1 // pred_region
      %196 = vsyncadd [#allocation4], 0
      %s198 = sshll.u32 [#allocation10], 4
      %s199 = int_to_ptr.vmem [resolvable:$true] %s198
      %s200 = sshll.u32 %s6, 4
      %s201 = int_to_ptr.hbm [resolvable:$true] %s200
      %203 = dma.vmem_to_hbm [thread:$0]  %s199, 256, %s201, [#allocation4]
    $region45: #{tpu_custom_call.1} parent=1 // pred_fallthru
      _
    // Predicated region
    $region46: #{tpu_custom_call.1} parent=1 // pred_check
      _
    $region47: #{tpu_custom_call.1} parent=1 // pred_check_branch
      %205 = sbr.rel (0) target = $region49
    $region48: #{tpu_custom_call.1} parent=1 // pred_region
      %207 = dma.done [#allocation4], 256
    $region49: #{tpu_custom_call.1} parent=1 // pred_fallthru
      _
    %208 = vsyncpa [#allocation3], 1
    %209 = vsyncpa [#allocation6], 1
    %210 = vsyncpa [#allocation9], 1
    %211 = vsyncpa [#allocation4], 1

</llo_original>
